<compile_context>
chip_gen: v7x
topology: tpu7x:2x2x1
jax: 0.10.0
libtpu: 0.0.40
codegen_flags: <defaults>
</compile_context>

<pallas_src>
import functools

import jax
import jax.numpy as jnp
from jax.experimental import pallas as pl
from jax.experimental.pallas import tpu as pltpu

_LANES = 512              # lane width of the flattened layout (multiple of 128)
_MAX_ROWS_PER_TILE = 256  # 256 * 512 * 4 B = 512 KiB per input block


def _choose_tiling(n):
    """Rows / row-tile for a flattened (rows, _LANES) view of n elements."""
    rows = -(-n // _LANES)            # ceil
    rows = -(-rows // 8) * 8          # full sublane occupancy
    tile_r = min(_MAX_ROWS_PER_TILE, rows)
    rows = -(-rows // tile_r) * tile_r
    return rows, tile_r


def _fused_cls_loss_kernel(x_ref, y_ref, w_ref,
                           asl_ref, bce_ref, wsum_ref,
                           asl_acc, bce_acc, w_acc,
                           *, gamma_neg, gamma_pos, clip, eps):
    r = pl.program_id(1)

    # Zero the tile-shaped accumulators on the first class tile of each head.
    @pl.when(r == 0)
    def _():
        asl_acc[...] = jnp.zeros_like(asl_acc)
        bce_acc[...] = jnp.zeros_like(bce_acc)
        w_acc[...] = jnp.zeros_like(w_acc)

    x = x_ref[0].astype(jnp.float32)      # (tile_r, _LANES)
    y = y_ref[...].astype(jnp.float32)
    w = w_ref[...].astype(jnp.float32)

    # Shared transcendental core: one exp feeds sigmoid and softplus.
    e = jnp.exp(-jnp.abs(x))                        # EUP
    sp = jnp.maximum(x, 0.0) + jnp.log1p(e)         # softplus(x), stable   # EUP

    # ---- BCE with logits (weighted sum; normalized by sum(w) in glue) ----
    # max(x,0) - x*y + log1p(exp(-|x|)) == softplus(x) - x*y
    bce_acc[...] += (sp - x * y) * w

    # ---- Asymmetric loss (ASL) ----
    p = jnp.where(x >= 0.0, 1.0, e) / (1.0 + e)     # sigmoid(x), reuses e  # EUP
    xs_neg = 1.0 - p
    if clip is not None and clip > 0:
        xs_neg = jnp.minimum(xs_neg + clip, 1.0)

    log_eps = jnp.log(jnp.float32(eps))
    log_pos = jnp.maximum(x - sp, log_eps)          # log(clamp(sigmoid(x), eps))
    log_neg = jnp.log(jnp.maximum(xs_neg, eps))     # EUP
    loss = y * log_pos + (1.0 - y) * log_neg

    if gamma_neg > 0 or gamma_pos > 0:
        pt = p * y + xs_neg * (1.0 - y)
        gamma = gamma_pos * y + gamma_neg * (1.0 - y)
        focal = jnp.exp(gamma * jnp.log(jnp.maximum(1.0 - pt, 1e-30)))  # EUP x2
        loss = loss * focal

    asl_acc[...] += loss * w
    w_acc[...] += w

    # Cross-lane reductions + output stores only once per head (last class tile).
    @pl.when(r == pl.num_programs(1) - 1)
    def _():
        asl_ref[...] = jnp.broadcast_to(
            (-jnp.sum(asl_acc[...])).reshape(1, 1, 1), asl_ref.shape)
        bce_ref[...] = jnp.broadcast_to(
            jnp.sum(bce_acc[...]).reshape(1, 1, 1), bce_ref.shape)
        wsum_ref[...] = jnp.broadcast_to(
            jnp.sum(w_acc[...]).reshape(1, 1, 1), wsum_ref.shape)


@functools.partial(jax.jit, static_argnames=("gamma_neg", "gamma_pos", "clip", "eps"))
def _fused_cls_losses(logits_stack, onehot, weights, *,
                      gamma_neg, gamma_pos, clip, eps=1e-8):
    """logits_stack: (H, B, C) (main + aux heads). Returns (asl[H], bce[H])."""
    H = logits_stack.shape[0]
    n = onehot.size
    rows, tile_r = _choose_tiling(n)
    n_pad = rows * _LANES

    def to_tiles(a, has_heads):
        flat = a.reshape((H, n)) if has_heads else a.reshape((n,))
        pad = n_pad - n
        if pad:
            pad_width = ((0, 0), (0, pad)) if has_heads else ((0, pad),)
            flat = jnp.pad(flat, pad_width)        # zero weights kill padded terms
        return flat.reshape((H, rows, _LANES) if has_heads else (rows, _LANES))

    x = to_tiles(logits_stack, True)   # native dtype; upcast happens in-kernel
    y = to_tiles(onehot, False)
    w = to_tiles(weights, False)

    grid = (H, rows // tile_r)
    kernel = functools.partial(_fused_cls_loss_kernel, gamma_neg=gamma_neg,
                               gamma_pos=gamma_pos, clip=clip, eps=eps)

    out_spec = pl.BlockSpec((1, 8, 128), lambda h, r: (h, 0, 0))
    asl_t, bce_t, wsum_t = pl.pallas_call(
        kernel,
        out_shape=(jax.ShapeDtypeStruct((H, 8, 128), jnp.float32),) * 3,
        grid=grid,
        in_specs=[
            pl.BlockSpec((1, tile_r, _LANES), lambda h, r: (h, r, 0)),
            pl.BlockSpec((tile_r, _LANES), lambda h, r: (r, 0)),
            pl.BlockSpec((tile_r, _LANES), lambda h, r: (r, 0)),
        ],
        out_specs=(out_spec, out_spec, out_spec),
        scratch_shapes=[pltpu.VMEM((tile_r, _LANES), jnp.float32),
                        pltpu.VMEM((tile_r, _LANES), jnp.float32),
                        pltpu.VMEM((tile_r, _LANES), jnp.float32)],
        compiler_params=pltpu.CompilerParams(
            dimension_semantics=("parallel", "arbitrary")),
    )(x, y, w)

    asl = asl_t[:, 0, 0]                    # (H,)
    bce_sum = bce_t[:, 0, 0]                # (H,)
    w_sum = wsum_t[0, 0, 0]
    bce = jnp.where(w_sum > 0, bce_sum / jnp.maximum(w_sum, 1e-12),
                    jnp.zeros_like(bce_sum))          # zero-weight guard
    return asl, bce


def _accuracy(output, onehot):
    # torch: target = onehot.nonzero()[:, 1]; num_gt = target.size(0)
    #        pred = output.topk(num_gt, 1)[1]; |set(pred[0]) & set(target)| / num_gt * 100
    # TODO(synk): dynamic-size topk + python set intersection has no clean Pallas
    #             equivalent (data-dependent shapes); computed in plain JAX glue.
    num_gt = jnp.sum(onehot > 0)
    C = output.shape[1]
    order = jnp.argsort(-output[0])                 # descending order of row-0 logits
    col_has_pos = jnp.any(onehot > 0, axis=0)       # membership in set(target)
    take = jnp.arange(C) < num_gt                   # only the first num_gt predictions
    inter = jnp.sum(jnp.where(take, col_has_pos[order], False))
    return jnp.where(num_gt > 0,
                     inter.astype(jnp.float32) / num_gt.astype(jnp.float32) * 100.0,
                     jnp.float32(100.0))


class ClassDecoderCriterion:
    """JAX/Pallas port of models/metr ClassDecoderCriterion forward()."""

    def __init__(self, args):
        self.losses = args["prompt_indicator_losses"]
        self.gamma_neg = float(args["prompt_indicator_asl_gamma_neg"])
        self.gamma_pos = float(args["prompt_indicator_asl_gamma_pos"])
        self.clip = float(args["prompt_indicator_asl_clip"])

    def prepare_targets(self, targets):
        return {
            "multi_label_onehot": jnp.stack(
                [t["multi_label_onehot"] for t in targets], axis=0),
            "multi_label_weights": jnp.stack(
                [t["multi_label_weights"] for t in targets], axis=0),
        }

    def forward(self, outputs, aux_outputs, targets):
        targets = self.prepare_targets(targets)
        onehot = targets["multi_label_onehot"]
        weights = targets["multi_label_weights"]

        # One fused launch for the main head + every aux head, both losses.
        logits_stack = jnp.stack(
            [outputs["cls_label_logits"]]
            + [aux["cls_label_logits"] for aux in aux_outputs], axis=0)
        asl, bce = _fused_cls_losses(
            logits_stack, onehot, weights,
            gamma_neg=self.gamma_neg, gamma_pos=self.gamma_pos, clip=self.clip)
        per_head = {"asl": asl, "bce": bce}

        loss_dict = {}
        for loss in self.losses:
            vals = per_head[loss]
            loss_dict[f"cls_{loss}"] = vals[0]
            for i in range(len(aux_outputs)):
                loss_dict[f"cls_{loss}_{i}"] = vals[i + 1]
        loss_dict["asl_class_error"] = 100.0 - _accuracy(
            outputs["cls_label_logits"], onehot)
        return loss_dict


if __name__ == "__main__":
    key = jax.random.PRNGKey(0)
    B, C = 2, 128
    k1, k2, k3, k4 = jax.random.split(key, 4)

    logits = jax.random.normal(k1, (B, C), jnp.float32)
    aux_logits = [jax.random.normal(k2, (B, C), jnp.float32),
                  jax.random.normal(k3, (B, C), jnp.float32)]
    onehot = (jax.random.uniform(k4, (B, C)) < 0.1).astype(jnp.float32)
    weights = jnp.ones((B, C), jnp.float32)

    targets = [{"multi_label_onehot": onehot[b],
                "multi_label_weights": weights[b]} for b in range(B)]
    outputs = {"cls_label_logits": logits}
    aux_outputs = [{"cls_label_logits": a} for a in aux_logits]

    args = {
        "prompt_indicator_losses": ["asl", "bce"],
        "prompt_indicator_asl_gamma_neg": 4.0,
        "prompt_indicator_asl_gamma_pos": 1.0,
        "prompt_indicator_asl_clip": 0.05,
        "prompt_indicator_asl_optimized": False,
    }

    criterion = ClassDecoderCriterion(args)
    loss_dict = jax.block_until_ready(criterion.forward(outputs, aux_outputs, targets))

    # Pure-JAX reference check (same math as the PyTorch module).
    def ref_losses(x, y, w, gn, gp, clip, eps=1e-8):
        x = x.astype(jnp.float32); y = y.astype(jnp.float32); w = w.astype(jnp.float32)
        p = jax.nn.sigmoid(x)
        xs_neg = jnp.minimum(1.0 - p + clip, 1.0) if (clip and clip > 0) else 1.0 - p
        loss = (y * jnp.log(jnp.maximum(p, eps))
                + (1.0 - y) * jnp.log(jnp.maximum(xs_neg, eps)))
        if gn > 0 or gp > 0:
            pt = p * y + xs_neg * (1.0 - y)
            loss = loss * jnp.power(1.0 - pt, gp * y + gn * (1.0 - y))
        asl = -jnp.sum(loss * w)
        bce = jnp.sum((jnp.maximum(x, 0.0) - x * y
                       + jnp.log1p(jnp.exp(-jnp.abs(x)))) * w) / jnp.sum(w)
        return asl, bce

    ok = True
    for i, lg in enumerate([logits] + aux_logits):
        r_asl, r_bce = ref_losses(lg, onehot, weights, 4.0, 1.0, 0.05)
        k_asl = loss_dict["cls_asl"] if i == 0 else loss_dict[f"cls_asl_{i-1}"]
        k_bce = loss_dict["cls_bce"] if i == 0 else loss_dict[f"cls_bce_{i-1}"]
        ok &= bool(jnp.allclose(k_asl, r_asl, rtol=1e-3, atol=1e-3))
        ok &= bool(jnp.allclose(k_bce, r_bce, rtol=1e-3, atol=1e-3))
    assert ok, "Pallas losses do not match the pure-JAX reference"
    print("KERNEL_OK")
</pallas_src>

<mosaic_0001>
module attributes {stable_mosaic.version = 11 : i64} {
  func.func @_fused_cls_loss_kernel(%arg0: i32, %arg1: i32, %arg2: memref<1x8x512xf32, #tpu.memory_space<vmem>>, %arg3: memref<8x512xf32, #tpu.memory_space<vmem>>, %arg4: memref<8x512xf32, #tpu.memory_space<vmem>>, %arg5: memref<1x8x128xf32, #tpu.memory_space<vmem>>, %arg6: memref<1x8x128xf32, #tpu.memory_space<vmem>>, %arg7: memref<1x8x128xf32, #tpu.memory_space<vmem>>, %arg8: memref<8x512xf32, #tpu.memory_space<vmem>>, %arg9: memref<8x512xf32, #tpu.memory_space<vmem>>, %arg10: memref<8x512xf32, #tpu.memory_space<vmem>>) attributes {dimension_semantics = [#tpu.dimension_semantics<parallel>, #tpu.dimension_semantics<arbitrary>], iteration_bounds = array<i64: 3, 1>, scalar_prefetch = 0 : i64, scratch_operands = 3 : i64, tpu.core_type = #tpu.core_type<tc>, window_params = [{transform_indices = @transform_0, window_bounds = array<i64: 1, 8, 512>}, {transform_indices = @transform_1, window_bounds = array<i64: 8, 512>}, {transform_indices = @transform_2, window_bounds = array<i64: 8, 512>}, {transform_indices = @transform_3, window_bounds = array<i64: 1, 8, 128>}, {transform_indices = @transform_4, window_bounds = array<i64: 1, 8, 128>}, {transform_indices = @transform_5, window_bounds = array<i64: 1, 8, 128>}]} {
    %c0_i32 = arith.constant 0 : i32
    %0 = arith.cmpi eq, %arg1, %c0_i32 : i32
    %1 = arith.extui %0 : i1 to i32
    %c0_i32_0 = arith.constant 0 : i32
    %2 = arith.cmpi ne, %1, %c0_i32_0 : i32
    scf.if %2 {
      %cst_37 = arith.constant 0.000000e+00 : f32
      %76 = vector.broadcast %cst_37 : f32 to vector<8x512xf32>
      %c0_38 = arith.constant 0 : index
      %c0_39 = arith.constant 0 : index
      %77 = vector.load %arg8[%c0_38, %c0_39] : memref<8x512xf32, #tpu.memory_space<vmem>>, vector<8x512xf32>
      tpu.vector_store %arg8[%c0_38, %c0_39], %76 {strides = array<i32>} : memref<8x512xf32, #tpu.memory_space<vmem>>, vector<8x512xf32>,
      %cst_40 = arith.constant 0.000000e+00 : f32
      %78 = vector.broadcast %cst_40 : f32 to vector<8x512xf32>
      %c0_41 = arith.constant 0 : index
      %c0_42 = arith.constant 0 : index
      %79 = vector.load %arg9[%c0_41, %c0_42] : memref<8x512xf32, #tpu.memory_space<vmem>>, vector<8x512xf32>
      tpu.vector_store %arg9[%c0_41, %c0_42], %78 {strides = array<i32>} : memref<8x512xf32, #tpu.memory_space<vmem>>, vector<8x512xf32>,
      %cst_43 = arith.constant 0.000000e+00 : f32
      %80 = vector.broadcast %cst_43 : f32 to vector<8x512xf32>
      %c0_44 = arith.constant 0 : index
      %c0_45 = arith.constant 0 : index
      %81 = vector.load %arg10[%c0_44, %c0_45] : memref<8x512xf32, #tpu.memory_space<vmem>>, vector<8x512xf32>
      tpu.vector_store %arg10[%c0_44, %c0_45], %80 {strides = array<i32>} : memref<8x512xf32, #tpu.memory_space<vmem>>, vector<8x512xf32>,
    } else {
    }
    %c0 = arith.constant 0 : index
    %c0_1 = arith.constant 0 : index
    %c0_2 = arith.constant 0 : index
    %3 = vector.load %arg2[%c0, %c0_1, %c0_2] : memref<1x8x512xf32, #tpu.memory_space<vmem>>, vector<1x8x512xf32>
    %4 = vector.shape_cast %3 : vector<1x8x512xf32> to vector<8x512xf32>
    %c0_3 = arith.constant 0 : index
    %c0_4 = arith.constant 0 : index
    %5 = vector.load %arg3[%c0_3, %c0_4] : memref<8x512xf32, #tpu.memory_space<vmem>>, vector<8x512xf32>
    %c0_5 = arith.constant 0 : index
    %c0_6 = arith.constant 0 : index
    %6 = vector.load %arg4[%c0_5, %c0_6] : memref<8x512xf32, #tpu.memory_space<vmem>>, vector<8x512xf32>
    %7 = math.absf %4 : vector<8x512xf32>
    %cst = arith.constant 0.000000e+00 : f32
    %8 = vector.broadcast %cst : f32 to vector<8x512xf32>
    %9 = arith.subf %8, %7 : vector<8x512xf32>
    %10 = math.exp %9 : vector<8x512xf32>
    %cst_7 = arith.constant 0.000000e+00 : f32
    %11 = vector.broadcast %cst_7 : f32 to vector<8x512xf32>
    %12 = arith.maximumf %4, %11 : vector<8x512xf32>
    %13 = math.log1p %10 : vector<8x512xf32>
    %14 = arith.addf %12, %13 : vector<8x512xf32>
    %c0_8 = arith.constant 0 : index
    %c0_9 = arith.constant 0 : index
    %15 = vector.load %arg9[%c0_8, %c0_9] : memref<8x512xf32, #tpu.memory_space<vmem>>, vector<8x512xf32>
    %16 = arith.mulf %4, %5 : vector<8x512xf32>
    %17 = arith.subf %14, %16 : vector<8x512xf32>
    %18 = arith.mulf %17, %6 : vector<8x512xf32>
    %19 = arith.addf %15, %18 : vector<8x512xf32>
    %c0_10 = arith.constant 0 : index
    %c0_11 = arith.constant 0 : index
    %20 = vector.load %arg9[%c0_10, %c0_11] : memref<8x512xf32, #tpu.memory_space<vmem>>, vector<8x512xf32>
    tpu.vector_store %arg9[%c0_10, %c0_11], %19 {strides = array<i32>} : memref<8x512xf32, #tpu.memory_space<vmem>>, vector<8x512xf32>,
    %cst_12 = arith.constant 0.000000e+00 : f32
    %21 = vector.broadcast %cst_12 : f32 to vector<8x512xf32>
    %22 = arith.cmpf oge, %4, %21 : vector<8x512xf32>
    %cst_13 = arith.constant 1.000000e+00 : f32
    %23 = vector.broadcast %cst_13 : f32 to vector<8x512xf32>
    %24 = arith.select %22, %23, %10 : vector<8x512xi1>, vector<8x512xf32>
    %cst_14 = arith.constant 1.000000e+00 : f32
    %25 = vector.broadcast %cst_14 : f32 to vector<8x512xf32>
    %26 = arith.addf %25, %10 : vector<8x512xf32>
    %27 = arith.divf %24, %26 : vector<8x512xf32>
    %cst_15 = arith.constant 1.000000e+00 : f32
    %28 = vector.broadcast %cst_15 : f32 to vector<8x512xf32>
    %29 = arith.subf %28, %27 : vector<8x512xf32>
    %cst_16 = arith.constant 5.000000e-02 : f32
    %30 = vector.broadcast %cst_16 : f32 to vector<8x512xf32>
    %31 = arith.addf %29, %30 : vector<8x512xf32>
    %cst_17 = arith.constant 1.000000e+00 : f32
    %32 = vector.broadcast %cst_17 : f32 to vector<8x512xf32>
    %33 = arith.minimumf %31, %32 : vector<8x512xf32>
    %cst_18 = arith.constant 9.99999993E-9 : f32
    %34 = math.log %cst_18 : f32
    %35 = arith.subf %4, %14 : vector<8x512xf32>
    %36 = vector.broadcast %34 : f32 to vector<8x512xf32>
    %37 = arith.maximumf %35, %36 : vector<8x512xf32>
    %cst_19 = arith.constant 9.99999993E-9 : f32
    %38 = vector.broadcast %cst_19 : f32 to vector<8x512xf32>
    %39 = arith.maximumf %33, %38 : vector<8x512xf32>
    %40 = math.log %39 : vector<8x512xf32>
    %41 = arith.mulf %5, %37 : vector<8x512xf32>
    %cst_20 = arith.constant 1.000000e+00 : f32
    %42 = vector.broadcast %cst_20 : f32 to vector<8x512xf32>
    %43 = arith.subf %42, %5 : vector<8x512xf32>
    %44 = arith.mulf %43, %40 : vector<8x512xf32>
    %45 = arith.addf %41, %44 : vector<8x512xf32>
    %46 = arith.mulf %27, %5 : vector<8x512xf32>
    %cst_21 = arith.constant 1.000000e+00 : f32
    %47 = vector.broadcast %cst_21 : f32 to vector<8x512xf32>
    %48 = arith.subf %47, %5 : vector<8x512xf32>
    %49 = arith.mulf %33, %48 : vector<8x512xf32>
    %50 = arith.addf %46, %49 : vector<8x512xf32>
    %cst_22 = arith.constant 1.000000e+00 : f32
    %51 = vector.broadcast %cst_22 : f32 to vector<8x512xf32>
    %52 = arith.mulf %51, %5 : vector<8x512xf32>
    %cst_23 = arith.constant 1.000000e+00 : f32
    %53 = vector.broadcast %cst_23 : f32 to vector<8x512xf32>
    %54 = arith.subf %53, %5 : vector<8x512xf32>
    %cst_24 = arith.constant 4.000000e+00 : f32
    %55 = vector.broadcast %cst_24 : f32 to vector<8x512xf32>
    %56 = arith.mulf %55, %54 : vector<8x512xf32>
    %57 = arith.addf %52, %56 : vector<8x512xf32>
    %cst_25 = arith.constant 1.000000e+00 : f32
    %58 = vector.broadcast %cst_25 : f32 to vector<8x512xf32>
    %59 = arith.subf %58, %50 : vector<8x512xf32>
    %cst_26 = arith.constant 1.000000e-30 : f32
    %60 = vector.broadcast %cst_26 : f32 to vector<8x512xf32>
    %61 = arith.maximumf %59, %60 : vector<8x512xf32>
    %62 = math.log %61 : vector<8x512xf32>
    %63 = arith.mulf %57, %62 : vector<8x512xf32>
    %64 = math.exp %63 : vector<8x512xf32>
    %65 = arith.mulf %45, %64 : vector<8x512xf32>
    %c0_27 = arith.constant 0 : index
    %c0_28 = arith.constant 0 : index
    %66 = vector.load %arg8[%c0_27, %c0_28] : memref<8x512xf32, #tpu.memory_space<vmem>>, vector<8x512xf32>
    %67 = arith.mulf %65, %6 : vector<8x512xf32>
    %68 = arith.addf %66, %67 : vector<8x512xf32>
    %c0_29 = arith.constant 0 : index
    %c0_30 = arith.constant 0 : index
    %69 = vector.load %arg8[%c0_29, %c0_30] : memref<8x512xf32, #tpu.memory_space<vmem>>, vector<8x512xf32>
    tpu.vector_store %arg8[%c0_29, %c0_30], %68 {strides = array<i32>} : memref<8x512xf32, #tpu.memory_space<vmem>>, vector<8x512xf32>,
    %c0_31 = arith.constant 0 : index
    %c0_32 = arith.constant 0 : index
    %70 = vector.load %arg10[%c0_31, %c0_32] : memref<8x512xf32, #tpu.memory_space<vmem>>, vector<8x512xf32>
    %71 = arith.addf %70, %6 : vector<8x512xf32>
    %c0_33 = arith.constant 0 : index
    %c0_34 = arith.constant 0 : index
    %72 = vector.load %arg10[%c0_33, %c0_34] : memref<8x512xf32, #tpu.memory_space<vmem>>, vector<8x512xf32>
    tpu.vector_store %arg10[%c0_33, %c0_34], %71 {strides = array<i32>} : memref<8x512xf32, #tpu.memory_space<vmem>>, vector<8x512xf32>,
    %c0_i32_35 = arith.constant 0 : i32
    %73 = arith.cmpi eq, %arg1, %c0_i32_35 : i32
    %74 = arith.extui %73 : i1 to i32
    %c0_i32_36 = arith.constant 0 : i32
    %75 = arith.cmpi ne, %74, %c0_i32_36 : i32
    scf.if %75 {
      %c0_37 = arith.constant 0 : index
      %c0_38 = arith.constant 0 : index
      %76 = vector.load %arg8[%c0_37, %c0_38] : memref<8x512xf32, #tpu.memory_space<vmem>>, vector<8x512xf32>
      %77 = vector.shape_cast %76 : vector<8x512xf32> to vector<1x8x512xf32>
      %cst_39 = arith.constant dense<0.000000e+00> : vector<1xf32>
      %78 = vector.multi_reduction <add>, %77, %cst_39 [1, 2] : vector<1x8x512xf32> to vector<1xf32>
      %79 = vector.shape_cast %78 : vector<1xf32> to vector<1x1x1xf32>
      %80 = vector.extract %79[0, 0, 0] : f32 from vector<1x1x1xf32>
      %cst_40 = arith.constant 0.000000e+00 : f32
      %81 = arith.subf %cst_40, %80 : f32
      %82 = vector.broadcast %81 : f32 to vector<1x1x1xf32>
      %83 = vector.shape_cast %82 : vector<1x1x1xf32> to vector<1x1x1xf32>
      %84 = vector.broadcast %83 : vector<1x1x1xf32> to vector<1x8x128xf32>
      %c0_41 = arith.constant 0 : index
      %c0_42 = arith.constant 0 : index
      %c0_43 = arith.constant 0 : index
      %85 = vector.load %arg5[%c0_41, %c0_42, %c0_43] : memref<1x8x128xf32, #tpu.memory_space<vmem>>, vector<1x8x128xf32>
      tpu.vector_store %arg5[%c0_41, %c0_42, %c0_43], %84 {strides = array<i32>} : memref<1x8x128xf32, #tpu.memory_space<vmem>>, vector<1x8x128xf32>,
      %c0_44 = arith.constant 0 : index
      %c0_45 = arith.constant 0 : index
      %86 = vector.load %arg9[%c0_44, %c0_45] : memref<8x512xf32, #tpu.memory_space<vmem>>, vector<8x512xf32>
      %87 = vector.shape_cast %86 : vector<8x512xf32> to vector<1x8x512xf32>
      %cst_46 = arith.constant dense<0.000000e+00> : vector<1xf32>
      %88 = vector.multi_reduction <add>, %87, %cst_46 [1, 2] : vector<1x8x512xf32> to vector<1xf32>
      %89 = vector.shape_cast %88 : vector<1xf32> to vector<1x1x1xf32>
      %90 = vector.extract %89[0, 0, 0] : f32 from vector<1x1x1xf32>
      %91 = vector.broadcast %90 : f32 to vector<1x1x1xf32>
      %92 = vector.shape_cast %91 : vector<1x1x1xf32> to vector<1x1x1xf32>
      %93 = vector.broadcast %92 : vector<1x1x1xf32> to vector<1x8x128xf32>
      %c0_47 = arith.constant 0 : index
      %c0_48 = arith.constant 0 : index
      %c0_49 = arith.constant 0 : index
      %94 = vector.load %arg6[%c0_47, %c0_48, %c0_49] : memref<1x8x128xf32, #tpu.memory_space<vmem>>, vector<1x8x128xf32>
      tpu.vector_store %arg6[%c0_47, %c0_48, %c0_49], %93 {strides = array<i32>} : memref<1x8x128xf32, #tpu.memory_space<vmem>>, vector<1x8x128xf32>,
      %c0_50 = arith.constant 0 : index
      %c0_51 = arith.constant 0 : index
      %95 = vector.load %arg10[%c0_50, %c0_51] : memref<8x512xf32, #tpu.memory_space<vmem>>, vector<8x512xf32>
      %96 = vector.shape_cast %95 : vector<8x512xf32> to vector<1x8x512xf32>
      %cst_52 = arith.constant dense<0.000000e+00> : vector<1xf32>
      %97 = vector.multi_reduction <add>, %96, %cst_52 [1, 2] : vector<1x8x512xf32> to vector<1xf32>
      %98 = vector.shape_cast %97 : vector<1xf32> to vector<1x1x1xf32>
      %99 = vector.extract %98[0, 0, 0] : f32 from vector<1x1x1xf32>
      %100 = vector.broadcast %99 : f32 to vector<1x1x1xf32>
      %101 = vector.shape_cast %100 : vector<1x1x1xf32> to vector<1x1x1xf32>
      %102 = vector.broadcast %101 : vector<1x1x1xf32> to vector<1x8x128xf32>
      %c0_53 = arith.constant 0 : index
      %c0_54 = arith.constant 0 : index
      %c0_55 = arith.constant 0 : index
      %103 = vector.load %arg7[%c0_53, %c0_54, %c0_55] : memref<1x8x128xf32, #tpu.memory_space<vmem>>, vector<1x8x128xf32>
      tpu.vector_store %arg7[%c0_53, %c0_54, %c0_55], %102 {strides = array<i32>} : memref<1x8x128xf32, #tpu.memory_space<vmem>>, vector<1x8x128xf32>,
    } else {
    }
    return
  }
  func.func @transform_0(%arg0: i32, %arg1: i32) -> (i32, i32, i32) {
    %c0_i32 = arith.constant 0 : i32
    %c0_i32_0 = arith.constant 0 : i32
    return %arg0, %arg1, %c0_i32 : i32, i32, i32
  }
  func.func @transform_1(%arg0: i32, %arg1: i32) -> (i32, i32) {
    %c0_i32 = arith.constant 0 : i32
    %c0_i32_0 = arith.constant 0 : i32
    return %arg1, %c0_i32 : i32, i32
  }
  func.func @transform_2(%arg0: i32, %arg1: i32) -> (i32, i32) {
    %c0_i32 = arith.constant 0 : i32
    %c0_i32_0 = arith.constant 0 : i32
    return %arg1, %c0_i32 : i32, i32
  }
  func.func @transform_3(%arg0: i32, %arg1: i32) -> (i32, i32, i32) {
    %c0_i32 = arith.constant 0 : i32
    %c0_i32_0 = arith.constant 0 : i32
    %c0_i32_1 = arith.constant 0 : i32
    return %arg0, %c0_i32, %c0_i32_0 : i32, i32, i32
  }
  func.func @transform_4(%arg0: i32, %arg1: i32) -> (i32, i32, i32) {
    %c0_i32 = arith.constant 0 : i32
    %c0_i32_0 = arith.constant 0 : i32
    %c0_i32_1 = arith.constant 0 : i32
    return %arg0, %c0_i32, %c0_i32_0 : i32, i32, i32
  }
  func.func @transform_5(%arg0: i32, %arg1: i32) -> (i32, i32, i32) {
    %c0_i32 = arith.constant 0 : i32
    %c0_i32_0 = arith.constant 0 : i32
    %c0_i32_1 = arith.constant 0 : i32
    return %arg0, %c0_i32, %c0_i32_0 : i32, i32, i32
  }
}

</mosaic_0001>

<llo_original>
// kernel: _fused_cls_losses.1
$region0: #{_fused_cls_losses.1}
  #allocation0 [shape = 'u32[]', space=smem, size = 0x4, offset = 0x4, fixed_abs, tag = 'smem constant byte address 0x4 - core index']
  #allocation1 [shape = 'u32[144,128]{1,0:T(1,128)}', space=vmem, size = 0x12000, scoped, tag = 'internal scratch']
  #allocation2 [shape = 'f32[8,512]{1,0:T(8,128)}', space=vmem, size = 0x4000, scoped, tag = 'scratch operand']
  #allocation3 [shape = 'f32[8,512]{1,0:T(8,128)}', space=vmem, size = 0x4000, scoped, tag = 'scratch operand']
  #allocation4 [shape = 'f32[8,512]{1,0:T(8,128)}', space=vmem, size = 0x4000, scoped, tag = 'scratch operand']
  %s0 = inlined_call_operand.vmem [shape: f32[3,8,512], index: 0, kind: input, shape index: {}]
  %s1 = inlined_call_operand.vmem [shape: f32[8,512], index: 1, kind: input, shape index: {}]
  %s2 = inlined_call_operand.vmem [shape: f32[8,512], index: 2, kind: input, shape index: {}]
  %s3 = inlined_call_operand.vmem [shape: f32[3,8,128], index: 3, kind: output, shape index: {0}]
  %s4 = inlined_call_operand.vmem [shape: f32[3,8,128], index: 4, kind: output, shape index: {1}]
  %s5 = inlined_call_operand.vmem [shape: f32[3,8,128], index: 5, kind: output, shape index: {2}]
  %6 = xla_tuple %s3, %s4, %s5
  %s7 = sld [smem:[#allocation0]]
  $region69: #{_fused_cls_losses.1} parent=0
    _
  %s9 = ssub.s32 1, %s7
  %s10 = scalar_select 0, %s9, %s7
  loop: start=0, step=1, limit=5
  $region2: #{_fused_cls_losses.1} parent=0 // loop_pre_header
    _
  $region3: #{_fused_cls_losses.1} parent=0 // loop_header
    %s12 = sphi 0, %s16
    %p13 = scmp.ge.s32.totalorder %s12, 5
    %s19 = sphi 0, %s31
    %s20 = sphi 0, %s27
    %s21 = sphi 0, %s19
    %s22 = sphi 0, %s20
    %s23 = sphi 0, %s21
    %s24 = sphi 0, %s22
    %s36 = sphi 0, %s38
    %s39 = sphi 0, %s36
    %s40 = sphi 0, %s39
    %s56 = sphi 0, %s40
    %s62 = sphi 0, %s64
    %s65 = sphi 0, %s62
    %s66 = sphi 0, %s65
    %s82 = sphi 0, %s66
    %s88 = sphi 0, %s90
    %s91 = sphi 0, %s88
    %s92 = sphi 0, %s91
    %s108 = sphi 0, %s92
    %s114 = sphi 0, %s116
    %s117 = sphi 0, %s114
    %s118 = sphi 0, %s117
    %s134 = sphi 0, %s118
    %s140 = sphi 0, %s142
    %s143 = sphi 0, %s140
    %s144 = sphi 0, %s143
    %s160 = sphi 0, %s144
    %s166 = sphi 0, %s168
    %s169 = sphi 0, %s166
    %s170 = sphi 0, %s169
    %s186 = sphi 0, %s170
  $region4: #{_fused_cls_losses.1} parent=0 // loop_header_branch
    %15 = sbr.rel (%p13) target = $region8
  $region5: #{_fused_cls_losses.1} parent=0 // loop_body
    %s17 = ssub.s32 %s12, 1
    %s18 = ssub.s32 %s12, 2
    %s25 = sadd.s32 1, %s20
    %p26 = scmp.ge.s32.totalorder %s25, 1
    %s27 = scalar_select %p26, 0, %s25
    %s28 = sadd.s32 1, %s19
    %s29 = scalar_select %p26, %s28, %s19
    %p30 = scmp.ge.s32.totalorder %s29, 3
    %s31 = scalar_select %p30, 0, %s29
    %s32 = ssub.s32 %s19, %s31
    %s33 = ssub.s32 %s20, %s27
    %s34 = sor.u32 %s32, %s33
    %p35 = scmp.eq.s32.totalorder %s34, 0
    %s37 = sadd.s32 %s36, 1
    %s38 = scalar_select %p35, %s36, %s37
    %p41 = pneg %p35
    %p42 = scmp.eq.s32.totalorder %s12, 2
    %p43 = por %p41, %p42
    %p44 = scmp.ne.s32.totalorder %s36, %s39
    %p45 = scmp.eq.s32.totalorder %s12, 0
    %p46 = por %p44, %p45
    %p47 = scmp.ne.s32.totalorder %s36, %s39
    %p48 = scmp.eq.s32.totalorder %s17, 2
    %p49 = por %p47, %p48
    %p50 = scmp.ne.s32.totalorder %s39, %s40
    %p51 = scmp.eq.s32.totalorder %s17, 0
    %p52 = por %p50, %p51
    %p53 = scmp.ne.s32.totalorder %s39, %s40
    %p54 = scmp.eq.s32.totalorder %s18, 2
    %p55 = por %p53, %p54
    %p57 = scmp.ne.s32.totalorder %s40, %s56
    %p58 = scmp.eq.s32.totalorder %s18, 0
    %p59 = por %p57, %p58
    %s60 = ssub.s32 %s20, %s27
    %p61 = scmp.eq.s32.totalorder %s60, 0
    %s63 = sadd.s32 %s62, 1
    %s64 = scalar_select %p61, %s62, %s63
    %p67 = pneg %p61
    %p68 = scmp.eq.s32.totalorder %s12, 2
    %p69 = por %p67, %p68
    %p70 = scmp.ne.s32.totalorder %s62, %s65
    %p71 = scmp.eq.s32.totalorder %s12, 0
    %p72 = por %p70, %p71
    %p73 = scmp.ne.s32.totalorder %s62, %s65
    %p74 = scmp.eq.s32.totalorder %s17, 2
    %p75 = por %p73, %p74
    %p76 = scmp.ne.s32.totalorder %s65, %s66
    %p77 = scmp.eq.s32.totalorder %s17, 0
    %p78 = por %p76, %p77
    %p79 = scmp.ne.s32.totalorder %s65, %s66
    %p80 = scmp.eq.s32.totalorder %s18, 2
    %p81 = por %p79, %p80
    %p83 = scmp.ne.s32.totalorder %s66, %s82
    %p84 = scmp.eq.s32.totalorder %s18, 0
    %p85 = por %p83, %p84
    %s86 = ssub.s32 %s20, %s27
    %p87 = scmp.eq.s32.totalorder %s86, 0
    %s89 = sadd.s32 %s88, 1
    %s90 = scalar_select %p87, %s88, %s89
    %p93 = pneg %p87
    %p94 = scmp.eq.s32.totalorder %s12, 2
    %p95 = por %p93, %p94
    %p96 = scmp.ne.s32.totalorder %s88, %s91
    %p97 = scmp.eq.s32.totalorder %s12, 0
    %p98 = por %p96, %p97
    %p99 = scmp.ne.s32.totalorder %s88, %s91
    %p100 = scmp.eq.s32.totalorder %s17, 2
    %p101 = por %p99, %p100
    %p102 = scmp.ne.s32.totalorder %s91, %s92
    %p103 = scmp.eq.s32.totalorder %s17, 0
    %p104 = por %p102, %p103
    %p105 = scmp.ne.s32.totalorder %s91, %s92
    %p106 = scmp.eq.s32.totalorder %s18, 2
    %p107 = por %p105, %p106
    %p109 = scmp.ne.s32.totalorder %s92, %s108
    %p110 = scmp.eq.s32.totalorder %s18, 0
    %p111 = por %p109, %p110
    %s112 = ssub.s32 %s19, %s31
    %p113 = scmp.eq.s32.totalorder %s112, 0
    %s115 = sadd.s32 %s114, 1
    %s116 = scalar_select %p113, %s114, %s115
    %p119 = pneg %p113
    %p120 = scmp.eq.s32.totalorder %s12, 2
    %p121 = por %p119, %p120
    %p122 = scmp.ne.s32.totalorder %s114, %s117
    %p123 = scmp.eq.s32.totalorder %s12, 0
    %p124 = por %p122, %p123
    %p125 = scmp.ne.s32.totalorder %s114, %s117
    %p126 = scmp.eq.s32.totalorder %s17, 2
    %p127 = por %p125, %p126
    %p128 = scmp.ne.s32.totalorder %s117, %s118
    %p129 = scmp.eq.s32.totalorder %s17, 0
    %p130 = por %p128, %p129
    %p131 = scmp.ne.s32.totalorder %s117, %s118
    %p132 = scmp.eq.s32.totalorder %s18, 2
    %p133 = por %p131, %p132
    %p135 = scmp.ne.s32.totalorder %s118, %s134
    %p136 = scmp.eq.s32.totalorder %s18, 0
    %p137 = por %p135, %p136
    %s138 = ssub.s32 %s19, %s31
    %p139 = scmp.eq.s32.totalorder %s138, 0
    %s141 = sadd.s32 %s140, 1
    %s142 = scalar_select %p139, %s140, %s141
    %p145 = pneg %p139
    %p146 = scmp.eq.s32.totalorder %s12, 2
    %p147 = por %p145, %p146
    %p148 = scmp.ne.s32.totalorder %s140, %s143
    %p149 = scmp.eq.s32.totalorder %s12, 0
    %p150 = por %p148, %p149
    %p151 = scmp.ne.s32.totalorder %s140, %s143
    %p152 = scmp.eq.s32.totalorder %s17, 2
    %p153 = por %p151, %p152
    %p154 = scmp.ne.s32.totalorder %s143, %s144
    %p155 = scmp.eq.s32.totalorder %s17, 0
    %p156 = por %p154, %p155
    %p157 = scmp.ne.s32.totalorder %s143, %s144
    %p158 = scmp.eq.s32.totalorder %s18, 2
    %p159 = por %p157, %p158
    %p161 = scmp.ne.s32.totalorder %s144, %s160
    %p162 = scmp.eq.s32.totalorder %s18, 0
    %p163 = por %p161, %p162
    %s164 = ssub.s32 %s19, %s31
    %p165 = scmp.eq.s32.totalorder %s164, 0
    %s167 = sadd.s32 %s166, 1
    %s168 = scalar_select %p165, %s166, %s167
    %p171 = pneg %p165
    %p172 = scmp.eq.s32.totalorder %s12, 2
    %p173 = por %p171, %p172
    %p174 = scmp.ne.s32.totalorder %s166, %s169
    %p175 = scmp.eq.s32.totalorder %s12, 0
    %p176 = por %p174, %p175
    %p177 = scmp.ne.s32.totalorder %s166, %s169
    %p178 = scmp.eq.s32.totalorder %s17, 2
    %p179 = por %p177, %p178
    %p180 = scmp.ne.s32.totalorder %s169, %s170
    %p181 = scmp.eq.s32.totalorder %s17, 0
    %p182 = por %p180, %p181
    %p183 = scmp.ne.s32.totalorder %s169, %s170
    %p184 = scmp.eq.s32.totalorder %s18, 2
    %p185 = por %p183, %p184
    %p187 = scmp.ne.s32.totalorder %s170, %s186
    %p188 = scmp.eq.s32.totalorder %s18, 0
    %p189 = por %p187, %p188
    %p190 = scmp.le.s32.totalorder 1, %s12
    %p191 = scmp.lt.s32.totalorder %s12, 4
    %p192 = pnand %p190, %p191
    %p193 = pneg %p192
    // Predicated region
    $region9: #{_fused_cls_losses.1} parent=5 // pred_check
      _
    $region10: #{_fused_cls_losses.1} parent=5 // pred_check_branch
      %195 = sbr.rel (%p192) target = $region12
    $region11: #{_fused_cls_losses.1} parent=5 // pred_region
      %s196 = ssub.s32 %s12, 1
      // Predicated region
      $region13: #{_fused_cls_losses.1} parent=11 // pred_check
        %p197 = pneg %p78
      $region14: #{_fused_cls_losses.1} parent=11 // pred_check_branch
        %199 = sbr.rel (%p197) target = $region16
      $region15: #{_fused_cls_losses.1} parent=11 // pred_region
        %p200 = scmp.lt.s32.totalorder %s22, 0
        %s201 = scalar_select %p200, %s22, 0
        %s202 = smul.addr %s201, 4
        %s203 = smul.addr %s202, 8
        %s204 = scalar_lea.vmem %s1, %s203
      $region16: #{_fused_cls_losses.1} parent=11 // pred_fallthru
        _
      // Predicated region
      $region17: #{_fused_cls_losses.1} parent=11 // pred_check
        %p205 = pneg %p104
      $region18: #{_fused_cls_losses.1} parent=11 // pred_check_branch
        %207 = sbr.rel (%p205) target = $region20
      $region19: #{_fused_cls_losses.1} parent=11 // pred_region
        %p208 = scmp.lt.s32.totalorder %s22, 0
        %s209 = scalar_select %p208, %s22, 0
        %s210 = smul.addr %s209, 4
        %s211 = smul.addr %s210, 8
        %s212 = scalar_lea.vmem %s2, %s211
      $region20: #{_fused_cls_losses.1} parent=11 // pred_fallthru
        _
    $region12: #{_fused_cls_losses.1} parent=5 // pred_fallthru
      _
    %p213 = scmp.lt.s32.totalorder %s12, 3
    // Predicated region
    $region21: #{_fused_cls_losses.1} parent=5 // pred_check
      %p214 = pneg %p213
    $region22: #{_fused_cls_losses.1} parent=5 // pred_check_branch
      %216 = sbr.rel (%p214) target = $region24
    $region23: #{_fused_cls_losses.1} parent=5 // pred_region
      // Predicated region
      $region25: #{_fused_cls_losses.1} parent=23 // pred_check
        %p217 = pneg %p46
      $region26: #{_fused_cls_losses.1} parent=23 // pred_check_branch
        %219 = sbr.rel (%p217) target = $region28
      $region27: #{_fused_cls_losses.1} parent=23 // pred_region
        %p220 = scmp.lt.s32.totalorder %s19, 2
        %s221 = scalar_select %p220, %s19, 2
        %p222 = scmp.lt.s32.totalorder %s20, 0
        %s223 = scalar_select %p222, %s20, 0
        %s224 = smul.addr %s223, 4
        %s225 = smul.addr %s221, 4
        %s226 = sadd.s32 %s224, %s225
        %s227 = smul.addr %s226, 8
        %s228 = scalar_lea.vmem %s0, %s227
      $region28: #{_fused_cls_losses.1} parent=23 // pred_fallthru
        _
    $region24: #{_fused_cls_losses.1} parent=5 // pred_fallthru
      _
    %p229 = scmp.le.s32.totalorder 1, %s12
    %p230 = scmp.lt.s32.totalorder %s12, 4
    %p231 = pnand %p229, %p230
    %p232 = pneg %p231
    // Predicated region
    $region29: #{_fused_cls_losses.1} parent=5 // pred_check
      _
    $region30: #{_fused_cls_losses.1} parent=5 // pred_check_branch
      %234 = sbr.rel (%p231) target = $region32
    $region31: #{_fused_cls_losses.1} parent=5 // pred_region
      %s235 = ssub.s32 %s12, 1
      %p236 = scmp.lt.s32.totalorder %s21, 2
      %s237 = scalar_select %p236, %s21, 2
      %p238 = scmp.lt.s32.totalorder %s22, 0
      %s239 = scalar_select %p238, %s22, 0
      %s240 = smul.addr %s239, 4
      %s241 = smul.addr %s237, 4
      %s242 = sadd.s32 %s240, %s241
      %s243 = smul.addr %s242, 8
      %s244 = scalar_lea.vmem %s0, %s243
      %p245 = pneg %p52
      %p246 = pneg %p49
      %p247 = scmp.lt.s32.totalorder %s22, 0
      %s248 = scalar_select %p247, %s22, 0
      %s249 = smul.addr %s248, 4
      %s250 = smul.addr %s249, 8
      %s251 = scalar_lea.vmem %s1, %s250
      %p252 = pneg %p78
      %p253 = pneg %p75
      %p254 = scmp.lt.s32.totalorder %s22, 0
      %s255 = scalar_select %p254, %s22, 0
      %s256 = smul.addr %s255, 4
      %s257 = smul.addr %s256, 8
      %s258 = scalar_lea.vmem %s2, %s257
      %p259 = pneg %p104
      %p260 = pneg %p101
      %p261 = pneg %p130
      %p262 = pneg %p127
      %p263 = scmp.lt.s32.totalorder %s21, 2
      %s264 = scalar_select %p263, %s21, 2
      %s265 = smul.addr %s264, 8
      %s266 = scalar_lea.vmem %s3, %s265
      %p267 = pneg %p156
      %p268 = pneg %p153
      %p269 = scmp.lt.s32.totalorder %s21, 2
      %s270 = scalar_select %p269, %s21, 2
      %s271 = smul.addr %s270, 8
      %s272 = scalar_lea.vmem %s4, %s271
      %p273 = pneg %p182
      %p274 = pneg %p179
      %p275 = scmp.lt.s32.totalorder %s21, 2
      %s276 = scalar_select %p275, %s21, 2
      %s277 = smul.addr %s276, 8
      %s278 = scalar_lea.vmem %s5, %s277
      %p279 = scmp.lt.s32.totalorder %s21, 2
      %s280 = scalar_select %p279, %s21, 2
      %p281 = scmp.lt.s32.totalorder %s22, 0
      %s282 = scalar_select %p281, %s22, 0
      %s283 = smul.addr %s282, 4
      %s284 = smul.addr %s280, 4
      %s285 = sadd.s32 %s283, %s284
      %s286 = smul.addr %s285, 8
      %s287 = scalar_lea.vmem %s0, %s286
      %p288 = scmp.lt.s32.totalorder %s22, 0
      %s289 = scalar_select %p288, %s22, 0
      %s290 = smul.addr %s289, 4
      %s291 = smul.addr %s290, 8
      %s292 = scalar_lea.vmem %s1, %s291
      %p293 = scmp.lt.s32.totalorder %s22, 0
      %s294 = scalar_select %p293, %s22, 0
      %s295 = smul.addr %s294, 4
      %s296 = smul.addr %s295, 8
      %s297 = scalar_lea.vmem %s2, %s296
      %p298 = scmp.lt.s32.totalorder %s21, 2
      %s299 = scalar_select %p298, %s21, 2
      %s300 = smul.addr %s299, 8
      %s301 = scalar_lea.vmem %s3, %s300
      %p302 = scmp.lt.s32.totalorder %s21, 2
      %s303 = scalar_select %p302, %s21, 2
      %s304 = smul.addr %s303, 8
      %s305 = scalar_lea.vmem %s4, %s304
      %p306 = scmp.lt.s32.totalorder %s21, 2
      %s307 = scalar_select %p306, %s21, 2
      %s308 = smul.addr %s307, 8
      %s309 = scalar_lea.vmem %s5, %s308
      %p310 = scmp.eq.s32.totalorder %s22, 0
      // Predicated region
      $region33: #{_fused_cls_losses.1} parent=31 // pred_check
        %p311 = pneg %p310
      $region34: #{_fused_cls_losses.1} parent=31 // pred_check_branch
        %313 = sbr.rel (%p311) target = $region36
      $region35: #{_fused_cls_losses.1} parent=31 // pred_region
        %314 = vst [vmem:[#allocation2] sm:$0xff] 0.0
        %315 = vst [vmem:[#allocation2 + $0x8] sm:$0xff] 0.0
        %316 = vst [vmem:[#allocation2 + $0x10] sm:$0xff] 0.0
        %317 = vst [vmem:[#allocation2 + $0x18] sm:$0xff] 0.0
        %318 = vst [vmem:[#allocation3] sm:$0xff] 0.0
        %319 = vst [vmem:[#allocation3 + $0x8] sm:$0xff] 0.0
        %320 = vst [vmem:[#allocation3 + $0x10] sm:$0xff] 0.0
        %321 = vst [vmem:[#allocation3 + $0x18] sm:$0xff] 0.0
        %322 = vst [vmem:[#allocation4] sm:$0xff] 0.0
        %323 = vst [vmem:[#allocation4 + $0x8] sm:$0xff] 0.0
        %324 = vst [vmem:[#allocation4 + $0x10] sm:$0xff] 0.0
        %325 = vst [vmem:[#allocation4 + $0x18] sm:$0xff] 0.0
      $region36: #{_fused_cls_losses.1} parent=31 // pred_fallthru
        _
      %v326 = vld [vmem:[%s287] sm:$0xff]
      %v327 = vld [vmem:[%s287 + $0x8] sm:$0xff]
      %v328 = vld [vmem:[%s287 + $0x10] sm:$0xff]
      %v329 = vld [vmem:[%s287 + $0x18] sm:$0xff]
      %v330 = vld [vmem:[%s292] sm:$0xff]
      %v331 = vld [vmem:[%s292 + $0x8] sm:$0xff]
      %v332 = vld [vmem:[%s292 + $0x10] sm:$0xff]
      %v333 = vld [vmem:[%s292 + $0x18] sm:$0xff]
      %v334 = vld [vmem:[%s297] sm:$0xff]
      %v335 = vld [vmem:[%s297 + $0x8] sm:$0xff]
      %v336 = vld [vmem:[%s297 + $0x10] sm:$0xff]
      %v337 = vld [vmem:[%s297 + $0x18] sm:$0xff]
      %v338 = vand.u32 2147483647, %v326
      %v339 = vand.u32 2147483647, %v327
      %v340 = vand.u32 2147483647, %v328
      %v341 = vand.u32 2147483647, %v329
      %v342 = vsub.f32 0.0, %v338
      %v343 = vsub.f32 0.0, %v339
      %v344 = vsub.f32 0.0, %v340
      %v345 = vsub.f32 0.0, %v341
      %v346 = vmul.f32 %v342, 1.442695
      %v347 = vpow.pop %v346
      %v348 = vmul.f32 %v343, 1.442695
      %v349 = vpow.pop %v348
      %v350 = vmul.f32 %v344, 1.442695
      %v351 = vpow.pop %v350
      %v352 = vmul.f32 %v345, 1.442695
      %v353 = vpow.pop %v352
      %v354 = vmax.f32 %v326, 0.0
      %v355 = vmax.f32 %v327, 0.0
      %v356 = vmax.f32 %v328, 0.0
      %v357 = vmax.f32 %v329, 0.0
      %v358 = vadd.f32 %v347, 1.0
      %v359 = vlog2.pop %v358
      %v360 = vmul.f32 %v359, 0.6931472
      %v361 = vmul.f32 -0.5, %v347
      %v362 = vadd.f32 %v361, 1.0
      %v363 = vmul.f32 %v362, %v347
      %v364 = vand.u32 2147483647, %v347
      %vm365 = vcmp.lt.f32.partialorder %v364, 0.0004427343
      %v366 = vsel %vm365, %v363, %v360
      %v367 = vadd.f32 %v349, 1.0
      %v368 = vlog2.pop %v367
      %v369 = vmul.f32 %v368, 0.6931472
      %v370 = vmul.f32 -0.5, %v349
      %v371 = vadd.f32 %v370, 1.0
      %v372 = vmul.f32 %v371, %v349
      %v373 = vand.u32 2147483647, %v349
      %vm374 = vcmp.lt.f32.partialorder %v373, 0.0004427343
      %v375 = vsel %vm374, %v372, %v369
      %v376 = vadd.f32 %v351, 1.0
      %v377 = vlog2.pop %v376
      %v378 = vmul.f32 %v377, 0.6931472
      %v379 = vmul.f32 -0.5, %v351
      %v380 = vadd.f32 %v379, 1.0
      %v381 = vmul.f32 %v380, %v351
      %v382 = vand.u32 2147483647, %v351
      %vm383 = vcmp.lt.f32.partialorder %v382, 0.0004427343
      %v384 = vsel %vm383, %v381, %v378
      %v385 = vadd.f32 %v353, 1.0
      %v386 = vlog2.pop %v385
      %v387 = vmul.f32 %v386, 0.6931472
      %v388 = vmul.f32 -0.5, %v353
      %v389 = vadd.f32 %v388, 1.0
      %v390 = vmul.f32 %v389, %v353
      %v391 = vand.u32 2147483647, %v353
      %vm392 = vcmp.lt.f32.partialorder %v391, 0.0004427343
      %v393 = vsel %vm392, %v390, %v387
      %v394 = vadd.f32 %v354, %v366
      %v395 = vadd.f32 %v355, %v375
      %v396 = vadd.f32 %v356, %v384
      %v397 = vadd.f32 %v357, %v393
      %v398 = vld [vmem:[#allocation3] sm:$0xff]
      %v399 = vld [vmem:[#allocation3 + $0x8] sm:$0xff]
      %v400 = vld [vmem:[#allocation3 + $0x10] sm:$0xff]
      %v401 = vld [vmem:[#allocation3 + $0x18] sm:$0xff]
      %v402 = vmul.f32 %v326, %v330
      %v403 = vmul.f32 %v327, %v331
      %v404 = vmul.f32 %v328, %v332
      %v405 = vmul.f32 %v329, %v333
      %v406 = vsub.f32 %v394, %v402
      %v407 = vsub.f32 %v395, %v403
      %v408 = vsub.f32 %v396, %v404
      %v409 = vsub.f32 %v397, %v405
      %v410 = vmul.f32 %v406, %v334
      %v411 = vmul.f32 %v407, %v335
      %v412 = vmul.f32 %v408, %v336
      %v413 = vmul.f32 %v409, %v337
      %v414 = vadd.f32 %v398, %v410
      %v415 = vadd.f32 %v399, %v411
      %v416 = vadd.f32 %v400, %v412
      %v417 = vadd.f32 %v401, %v413
      %418 = vst [vmem:[#allocation3] sm:$0xff] %v414
      %419 = vst [vmem:[#allocation3 + $0x8] sm:$0xff] %v415
      %420 = vst [vmem:[#allocation3 + $0x10] sm:$0xff] %v416
      %421 = vst [vmem:[#allocation3 + $0x18] sm:$0xff] %v417
      %vm422 = vcmp.ge.f32.partialorder %v326, 0.0
      %vm423 = vcmp.ge.f32.partialorder %v327, 0.0
      %vm424 = vcmp.ge.f32.partialorder %v328, 0.0
      %vm425 = vcmp.ge.f32.partialorder %v329, 0.0
      %v426 = vsel %vm422, 1.0, %v347
      %v427 = vsel %vm423, 1.0, %v349
      %v428 = vsel %vm424, 1.0, %v351
      %v429 = vsel %vm425, 1.0, %v353
      %v430 = vadd.f32 %v347, 1.0
      %v431 = vadd.f32 %v349, 1.0
      %v432 = vadd.f32 %v351, 1.0
      %v433 = vadd.f32 %v353, 1.0
      %v434 = vrcp.pop %v430
      %v435 = vmul.f32 %v426, %v434
      %v436 = vrcp.pop %v431
      %v437 = vmul.f32 %v427, %v436
      %v438 = vrcp.pop %v432
      %v439 = vmul.f32 %v428, %v438
      %v440 = vrcp.pop %v433
      %v441 = vmul.f32 %v429, %v440
      %v442 = vsub.f32 1.0, %v435
      %v443 = vsub.f32 1.0, %v437
      %v444 = vsub.f32 1.0, %v439
      %v445 = vsub.f32 1.0, %v441
      %v446 = vadd.f32 %v442, 0.05
      %v447 = vadd.f32 %v443, 0.05
      %v448 = vadd.f32 %v444, 0.05
      %v449 = vadd.f32 %v445, 0.05
      %v450 = vmin.f32 %v446, 1.0
      %v451 = vmin.f32 %v447, 1.0
      %v452 = vmin.f32 %v448, 1.0
      %v453 = vmin.f32 %v449, 1.0
      %v454 = vsub.f32 %v326, %v394
      %v455 = vsub.f32 %v327, %v395
      %v456 = vsub.f32 %v328, %v396
      %v457 = vsub.f32 %v329, %v397
      %v458 = vmax.f32 %v454, -18.420681
      %v459 = vmax.f32 %v455, -18.420681
      %v460 = vmax.f32 %v456, -18.420681
      %v461 = vmax.f32 %v457, -18.420681
      %v462 = vmax.f32 %v450, 1e-08
      %v463 = vmax.f32 %v451, 1e-08
      %v464 = vmax.f32 %v452, 1e-08
      %v465 = vmax.f32 %v453, 1e-08
      %v466 = vlog2.pop %v462
      %v467 = vmul.f32 %v466, 0.6931472
      %v468 = vlog2.pop %v463
      %v469 = vmul.f32 %v468, 0.6931472
      %v470 = vlog2.pop %v464
      %v471 = vmul.f32 %v470, 0.6931472
      %v472 = vlog2.pop %v465
      %v473 = vmul.f32 %v472, 0.6931472
      %v474 = vmul.f32 %v330, %v458
      %v475 = vmul.f32 %v331, %v459
      %v476 = vmul.f32 %v332, %v460
      %v477 = vmul.f32 %v333, %v461
      %v478 = vsub.f32 1.0, %v330
      %v479 = vsub.f32 1.0, %v331
      %v480 = vsub.f32 1.0, %v332
      %v481 = vsub.f32 1.0, %v333
      %v482 = vmul.f32 %v478, %v467
      %v483 = vmul.f32 %v479, %v469
      %v484 = vmul.f32 %v480, %v471
      %v485 = vmul.f32 %v481, %v473
      %v486 = vadd.f32 %v474, %v482
      %v487 = vadd.f32 %v475, %v483
      %v488 = vadd.f32 %v476, %v484
      %v489 = vadd.f32 %v477, %v485
      %v490 = vmul.f32 %v435, %v330
      %v491 = vmul.f32 %v437, %v331
      %v492 = vmul.f32 %v439, %v332
      %v493 = vmul.f32 %v441, %v333
      %v494 = vmul.f32 %v450, %v478
      %v495 = vmul.f32 %v451, %v479
      %v496 = vmul.f32 %v452, %v480
      %v497 = vmul.f32 %v453, %v481
      %v498 = vadd.f32 %v490, %v494
      %v499 = vadd.f32 %v491, %v495
      %v500 = vadd.f32 %v492, %v496
      %v501 = vadd.f32 %v493, %v497
      %v502 = vmul.f32 %v478, 4.0
      %v503 = vmul.f32 %v479, 4.0
      %v504 = vmul.f32 %v480, 4.0
      %v505 = vmul.f32 %v481, 4.0
      %v506 = vadd.f32 %v330, %v502
      %v507 = vadd.f32 %v331, %v503
      %v508 = vadd.f32 %v332, %v504
      %v509 = vadd.f32 %v333, %v505
      %v510 = vsub.f32 1.0, %v498
      %v511 = vsub.f32 1.0, %v499
      %v512 = vsub.f32 1.0, %v500
      %v513 = vsub.f32 1.0, %v501
      %v514 = vmax.f32 %v510, 1e-30
      %v515 = vmax.f32 %v511, 1e-30
      %v516 = vmax.f32 %v512, 1e-30
      %v517 = vmax.f32 %v513, 1e-30
      %v518 = vlog2.pop %v514
      %v519 = vmul.f32 %v518, 0.6931472
      %v520 = vlog2.pop %v515
      %v521 = vmul.f32 %v520, 0.6931472
      %v522 = vlog2.pop %v516
      %v523 = vmul.f32 %v522, 0.6931472
      %v524 = vlog2.pop %v517
      %v525 = vmul.f32 %v524, 0.6931472
      %v526 = vmul.f32 %v506, %v519
      %v527 = vmul.f32 %v507, %v521
      %v528 = vmul.f32 %v508, %v523
      %v529 = vmul.f32 %v509, %v525
      %v530 = vmul.f32 %v526, 1.442695
      %v531 = vpow.pop %v530
      %v532 = vmul.f32 %v527, 1.442695
      %v533 = vpow.pop %v532
      %v534 = vmul.f32 %v528, 1.442695
      %v535 = vpow.pop %v534
      %v536 = vmul.f32 %v529, 1.442695
      %v537 = vpow.pop %v536
      %v538 = vmul.f32 %v486, %v531
      %v539 = vmul.f32 %v487, %v533
      %v540 = vmul.f32 %v488, %v535
      %v541 = vmul.f32 %v489, %v537
      %v542 = vld [vmem:[#allocation2] sm:$0xff]
      %v543 = vld [vmem:[#allocation2 + $0x8] sm:$0xff]
      %v544 = vld [vmem:[#allocation2 + $0x10] sm:$0xff]
      %v545 = vld [vmem:[#allocation2 + $0x18] sm:$0xff]
      %v546 = vmul.f32 %v538, %v334
      %v547 = vmul.f32 %v539, %v335
      %v548 = vmul.f32 %v540, %v336
      %v549 = vmul.f32 %v541, %v337
      %v550 = vadd.f32 %v542, %v546
      %v551 = vadd.f32 %v543, %v547
      %v552 = vadd.f32 %v544, %v548
      %v553 = vadd.f32 %v545, %v549
      %554 = vst [vmem:[#allocation2] sm:$0xff] %v550
      %555 = vst [vmem:[#allocation2 + $0x8] sm:$0xff] %v551
      %556 = vst [vmem:[#allocation2 + $0x10] sm:$0xff] %v552
      %557 = vst [vmem:[#allocation2 + $0x18] sm:$0xff] %v553
      %v558 = vld [vmem:[#allocation4] sm:$0xff]
      %v559 = vld [vmem:[#allocation4 + $0x8] sm:$0xff]
      %v560 = vld [vmem:[#allocation4 + $0x10] sm:$0xff]
      %v561 = vld [vmem:[#allocation4 + $0x18] sm:$0xff]
      %v562 = vadd.f32 %v558, %v334
      %v563 = vadd.f32 %v559, %v335
      %v564 = vadd.f32 %v560, %v336
      %v565 = vadd.f32 %v561, %v337
      %566 = vst [vmem:[#allocation4] sm:$0xff] %v562
      %567 = vst [vmem:[#allocation4 + $0x8] sm:$0xff] %v563
      %568 = vst [vmem:[#allocation4 + $0x10] sm:$0xff] %v564
      %569 = vst [vmem:[#allocation4 + $0x18] sm:$0xff] %v565
      // Predicated region
      $region37: #{_fused_cls_losses.1} parent=31 // pred_check
        %p570 = pneg %p310
      $region38: #{_fused_cls_losses.1} parent=31 // pred_check_branch
        %572 = sbr.rel (%p570) target = $region40
      $region39: #{_fused_cls_losses.1} parent=31 // pred_region
        %v573 = vld [vmem:[#allocation2] sm:$0xff]
        %v574 = vld [vmem:[#allocation2 + $0x8] sm:$0xff]
        %v575 = vld [vmem:[#allocation2 + $0x10] sm:$0xff]
        %v576 = vld [vmem:[#allocation2 + $0x18] sm:$0xff]
        %v577 = vadd.f32 %v573, %v574
        %v578 = vadd.f32 %v577, %v575
        %v579 = vadd.f32 %v578, %v576
        %580 = vadd.xlane.f32.xlu0 %v579
        %v581 = vpop.xlane.xlu0 %580
        %v582 = vrot.slane %v581, 4
        %v583 = vadd.f32 %v581, %v582
        %v584 = vrot.slane %v583, 2
        %v585 = vadd.f32 %v583, %v584
        %v586 = vrot.slane %v585, 1
        %v587 = vadd.f32 %v585, %v586
        %s588 = vtos %v587
        %s589 = ssub.f32 0.0, %s588
        %v590 = vstv %s589
        %591 = vst [vmem:[%s301] sm:$0xff] %v590
        %v592 = vld [vmem:[#allocation3] sm:$0xff]
        %v593 = vld [vmem:[#allocation3 + $0x8] sm:$0xff]
        %v594 = vld [vmem:[#allocation3 + $0x10] sm:$0xff]
        %v595 = vld [vmem:[#allocation3 + $0x18] sm:$0xff]
        %v596 = vadd.f32 %v592, %v593
        %v597 = vadd.f32 %v596, %v594
        %v598 = vadd.f32 %v597, %v595
        %599 = vadd.xlane.f32.xlu0 %v598
        %v600 = vpop.xlane.xlu0 %599
        %v601 = vrot.slane %v600, 4
        %v602 = vadd.f32 %v600, %v601
        %v603 = vrot.slane %v602, 2
        %v604 = vadd.f32 %v602, %v603
        %v605 = vrot.slane %v604, 1
        %v606 = vadd.f32 %v604, %v605
        %s607 = vtos %v606
        %v608 = vstv %s607
        %609 = vst [vmem:[%s305] sm:$0xff] %v608
        %v610 = vld [vmem:[#allocation4] sm:$0xff]
        %v611 = vld [vmem:[#allocation4 + $0x8] sm:$0xff]
        %v612 = vld [vmem:[#allocation4 + $0x10] sm:$0xff]
        %v613 = vld [vmem:[#allocation4 + $0x18] sm:$0xff]
        %v614 = vadd.f32 %v610, %v611
        %v615 = vadd.f32 %v614, %v612
        %v616 = vadd.f32 %v615, %v613
        %617 = vadd.xlane.f32.xlu0 %v616
        %v618 = vpop.xlane.xlu0 %617
        %v619 = vrot.slane %v618, 4
        %v620 = vadd.f32 %v618, %v619
        %v621 = vrot.slane %v620, 2
        %v622 = vadd.f32 %v620, %v621
        %v623 = vrot.slane %v622, 1
        %v624 = vadd.f32 %v622, %v623
        %s625 = vtos %v624
        %v626 = vstv %s625
        %627 = vst [vmem:[%s309] sm:$0xff] %v626
      $region40: #{_fused_cls_losses.1} parent=31 // pred_fallthru
        _
      %p628 = scmp.lt.s32.totalorder %s21, 2
      %s629 = scalar_select %p628, %s21, 2
      %s630 = smul.addr %s629, 8
      %s631 = scalar_lea.vmem %s3, %s630
      %p632 = scmp.lt.s32.totalorder %s21, 2
      %s633 = scalar_select %p632, %s21, 2
      %s634 = smul.addr %s633, 8
      %s635 = scalar_lea.vmem %s4, %s634
      %p636 = scmp.lt.s32.totalorder %s21, 2
      %s637 = scalar_select %p636, %s21, 2
      %s638 = smul.addr %s637, 8
      %s639 = scalar_lea.vmem %s5, %s638
      // Predicated region
      $region41: #{_fused_cls_losses.1} parent=31 // pred_check
        %p640 = pneg %p127
      $region42: #{_fused_cls_losses.1} parent=31 // pred_check_branch
        %642 = sbr.rel (%p640) target = $region44
      $region43: #{_fused_cls_losses.1} parent=31 // pred_region
        _
      $region44: #{_fused_cls_losses.1} parent=31 // pred_fallthru
        _
      // Predicated region
      $region45: #{_fused_cls_losses.1} parent=31 // pred_check
        %p643 = pneg %p153
      $region46: #{_fused_cls_losses.1} parent=31 // pred_check_branch
        %645 = sbr.rel (%p643) target = $region48
      $region47: #{_fused_cls_losses.1} parent=31 // pred_region
        _
      $region48: #{_fused_cls_losses.1} parent=31 // pred_fallthru
        _
      // Predicated region
      $region49: #{_fused_cls_losses.1} parent=31 // pred_check
        %p646 = pneg %p179
      $region50: #{_fused_cls_losses.1} parent=31 // pred_check_branch
        %648 = sbr.rel (%p646) target = $region52
      $region51: #{_fused_cls_losses.1} parent=31 // pred_region
        _
      $region52: #{_fused_cls_losses.1} parent=31 // pred_fallthru
        _
    $region32: #{_fused_cls_losses.1} parent=5 // pred_fallthru
      _
    %p649 = scmp.le.s32.totalorder 2, %s12
    // Predicated region
    $region53: #{_fused_cls_losses.1} parent=5 // pred_check
      %p650 = pneg %p649
    $region54: #{_fused_cls_losses.1} parent=5 // pred_check_branch
      %652 = sbr.rel (%p650) target = $region56
    $region55: #{_fused_cls_losses.1} parent=5 // pred_region
      %s653 = ssub.s32 %s12, 2
      // Predicated region
      $region57: #{_fused_cls_losses.1} parent=55 // pred_check
        %p654 = pneg %p133
      $region58: #{_fused_cls_losses.1} parent=55 // pred_check_branch
        %656 = sbr.rel (%p654) target = $region60
      $region59: #{_fused_cls_losses.1} parent=55 // pred_region
        %p657 = scmp.lt.s32.totalorder %s23, 2
        %s658 = scalar_select %p657, %s23, 2
        %s659 = smul.addr %s658, 8
        %s660 = scalar_lea.vmem %s3, %s659
      $region60: #{_fused_cls_losses.1} parent=55 // pred_fallthru
        _
      // Predicated region
      $region61: #{_fused_cls_losses.1} parent=55 // pred_check
        %p661 = pneg %p159
      $region62: #{_fused_cls_losses.1} parent=55 // pred_check_branch
        %663 = sbr.rel (%p661) target = $region64
      $region63: #{_fused_cls_losses.1} parent=55 // pred_region
        %p664 = scmp.lt.s32.totalorder %s23, 2
        %s665 = scalar_select %p664, %s23, 2
        %s666 = smul.addr %s665, 8
        %s667 = scalar_lea.vmem %s4, %s666
      $region64: #{_fused_cls_losses.1} parent=55 // pred_fallthru
        _
      // Predicated region
      $region65: #{_fused_cls_losses.1} parent=55 // pred_check
        %p668 = pneg %p185
      $region66: #{_fused_cls_losses.1} parent=55 // pred_check_branch
        %670 = sbr.rel (%p668) target = $region68
      $region67: #{_fused_cls_losses.1} parent=55 // pred_region
        %p671 = scmp.lt.s32.totalorder %s23, 2
        %s672 = scalar_select %p671, %s23, 2
        %s673 = smul.addr %s672, 8
        %s674 = scalar_lea.vmem %s5, %s673
      $region68: #{_fused_cls_losses.1} parent=55 // pred_fallthru
        _
    $region56: #{_fused_cls_losses.1} parent=5 // pred_fallthru
      _
  $region6: #{_fused_cls_losses.1} parent=0 // loop_footer
    %s16 = sadd.s32 1, %s12
  $region7: #{_fused_cls_losses.1} parent=0 // loop_footer_branch
    %11 = sbr.rel target = $region3
  $region8: #{_fused_cls_losses.1} parent=0 // loop_exit
    _

</llo_original>
